<compile_context>
chip_gen: v7x
topology: tpu7x:2x2x1
jax: 0.10.0
libtpu: 0.0.40
codegen_flags: <defaults>
</compile_context>

<pallas_src>
import math

import jax
import jax.numpy as jnp
from jax.experimental import pallas as pl
from jax.experimental.pallas import tpu as pltpu

E = math.e
PHI = 1.618033988749895
PI = math.pi

_A_HALF = PHI / (2.0 * (PHI + 1.0))   # = (PHI/(PHI+1)) * 0.5
_HALF_PHI = PHI / 2.0
_INV_PHI = 1.0 / PHI
_K_SIN = PI / E

_LANE = 128
_TILE_BYTES = 2 * 1024 * 1024         # ~2 MiB/tile; in+out double-buffered -> ~8 MiB VMEM


def _magical_activation_kernel(consts_ref, x_ref, o_ref):
    # consts_ref (SMEM): [magic_intensity/(PHI+1), (1-magic_intensity)/(PHI+1)]
    x = x_ref[...].astype(jnp.float32)
    b = consts_ref[0]
    c = consts_ref[1]
    # sigmoid(PHI*x) == 0.5*(1 + tanh(PHI*x/2)); the *PHI and /(PHI+1) of the
    # reference formula are folded into _A_HALF / b / c.
    out = (
        _A_HALF * jnp.tanh(x * _HALF_PHI)
        + b * jnp.tanh(x * _INV_PHI)
        + c * jnp.sin(x * _K_SIN)
        + _A_HALF
    )
    o_ref[...] = out.astype(o_ref.dtype)


def magical_activation(x: jax.Array, magic_intensity: float = 0.5) -> jax.Array:
    """Pallas TPU implementation of MagicalActivation.forward (elementwise)."""
    orig_shape = x.shape
    n = x.size
    itemsize = jnp.dtype(x.dtype).itemsize

    flat = x.reshape(-1)

    # 1) Lane-dense 2-D view: widest lane width in {1024,...,128} dividing n;
    #    otherwise pad up to a multiple of 128 lanes.
    lane_w = None
    for w in (1024, 512, 256, 128):
        if n % w == 0:
            lane_w = w
            break
    if lane_w is None:
        lane_w = _LANE
        flat = jnp.pad(flat, (0, (-n) % lane_w))
    rows = flat.size // lane_w
    x2d = flat.reshape(rows, lane_w)

    # 2) Row tiling: ~2 MiB tiles, sublane-aligned for the dtype.
    sub = max(8, 32 // itemsize)  # 8 (f32) / 16 (bf16) / 32 (int8) sublane multiple
    target_rows = max(sub, (_TILE_BYTES // (lane_w * itemsize)) // sub * sub)
    if rows <= target_rows:
        tile_r = rows                                   # single full-array block
    else:
        tile_r = target_rows
        pad_rows = (-rows) % tile_r
        if pad_rows:
            x2d = jnp.pad(x2d, ((0, pad_rows), (0, 0)))
            rows += pad_rows
    grid_r = rows // tile_r

    consts = jnp.array(
        [magic_intensity / (PHI + 1.0), (1.0 - magic_intensity) / (PHI + 1.0)],
        dtype=jnp.float32,
    )

    out2d = pl.pallas_call(
        _magical_activation_kernel,
        out_shape=jax.ShapeDtypeStruct(x2d.shape, x2d.dtype),
        grid=(grid_r,),
        in_specs=[
            pl.BlockSpec(memory_space=pltpu.MemorySpace.SMEM),      # scalar params
            pl.BlockSpec((tile_r, lane_w), lambda i: (i, 0)),
        ],
        out_specs=pl.BlockSpec((tile_r, lane_w), lambda i: (i, 0)),
        compiler_params=pltpu.CompilerParams(
            dimension_semantics=("parallel",),  # shard row tiles across TCs on v7x
        ),
    )(consts, x2d)

    return out2d.reshape(-1)[:n].reshape(orig_shape)


def _reference(x: jax.Array, magic_intensity: float = 0.5) -> jax.Array:
    phi_sigmoid = jax.nn.sigmoid(x * PHI)
    unity_component = jnp.tanh(x / PHI) * magic_intensity
    transcendental = jnp.sin(x * PI / E) * (1.0 - magic_intensity)
    return (phi_sigmoid * PHI + unity_component + transcendental) / (PHI + 1.0)


if __name__ == "__main__":
    key = jax.random.PRNGKey(0)
    # NCHW input, same convention the PyTorch module would receive.
    x = jax.random.normal(key, (2, 4, 16, 16), dtype=jnp.float32)

    out = jax.block_until_ready(magical_activation(x, magic_intensity=0.5))
    ref = _reference(x, magic_intensity=0.5)
    assert out.shape == x.shape and out.dtype == x.dtype
    assert jnp.allclose(out, ref, atol=1e-5, rtol=1e-5)

    # Extra coverage: non-multiple-of-128 element count (padding fallback path).
    k1, k2 = jax.random.split(key)
    x_ragged = jax.random.normal(k1, (3, 5, 7, 11), dtype=jnp.float32)
    out_r = jax.block_until_ready(magical_activation(x_ragged, magic_intensity=0.25))
    assert jnp.allclose(out_r, _reference(x_ragged, 0.25), atol=1e-5, rtol=1e-5)

    # Extra coverage: multi-tile grid path (double-buffered pipeline).
    x_big = jax.random.normal(k2, (4, 64, 64, 64), dtype=jnp.float32)
    out_b = jax.block_until_ready(magical_activation(x_big, magic_intensity=0.75))
    assert jnp.allclose(out_b, _reference(x_big, 0.75), atol=1e-5, rtol=1e-5)

    print("KERNEL_OK")
</pallas_src>

<mosaic_0001>
module attributes {stable_mosaic.version = 11 : i64} {
  func.func @_magical_activation_kernel(%arg0: i32, %arg1: memref<2xf32, #tpu.memory_space<smem>>, %arg2: memref<2x1024xf32, #tpu.memory_space<vmem>>, %arg3: memref<2x1024xf32, #tpu.memory_space<vmem>>) attributes {dimension_semantics = [#tpu.dimension_semantics<parallel>], iteration_bounds = array<i64: 1>, scalar_prefetch = 0 : i64, scratch_operands = 0 : i64, tpu.core_type = #tpu.core_type<tc>, window_params = [{transform_indices = @transform_0, window_bounds = array<i64: 2>}, {transform_indices = @transform_1, window_bounds = array<i64: 2, 1024>}, {transform_indices = @transform_2, window_bounds = array<i64: 2, 1024>}]} {
    %c0 = arith.constant 0 : index
    %c0_0 = arith.constant 0 : index
    %0 = vector.load %arg2[%c0, %c0_0] : memref<2x1024xf32, #tpu.memory_space<vmem>>, vector<2x1024xf32>
    %c0_1 = arith.constant 0 : index
    %1 = memref.load %arg1[%c0_1] : memref<2xf32, #tpu.memory_space<smem>>
    %c1 = arith.constant 1 : index
    %2 = memref.load %arg1[%c1] : memref<2xf32, #tpu.memory_space<smem>>
    %cst = arith.constant 8.090170e-01 : f32
    %3 = vector.broadcast %cst : f32 to vector<2x1024xf32>
    %4 = arith.mulf %0, %3 : vector<2x1024xf32>
    %5 = math.tanh %4 : vector<2x1024xf32>
    %cst_2 = arith.constant 3.090170e-01 : f32
    %6 = vector.broadcast %cst_2 : f32 to vector<2x1024xf32>
    %7 = arith.mulf %6, %5 : vector<2x1024xf32>
    %cst_3 = arith.constant 6.180340e-01 : f32
    %8 = vector.broadcast %cst_3 : f32 to vector<2x1024xf32>
    %9 = arith.mulf %0, %8 : vector<2x1024xf32>
    %10 = math.tanh %9 : vector<2x1024xf32>
    %11 = vector.broadcast %1 : f32 to vector<2x1024xf32>
    %12 = arith.mulf %11, %10 : vector<2x1024xf32>
    %13 = arith.addf %7, %12 : vector<2x1024xf32>
    %cst_4 = arith.constant 1.15572739 : f32
    %14 = vector.broadcast %cst_4 : f32 to vector<2x1024xf32>
    %15 = arith.mulf %0, %14 : vector<2x1024xf32>
    %16 = math.sin %15 : vector<2x1024xf32>
    %17 = vector.broadcast %2 : f32 to vector<2x1024xf32>
    %18 = arith.mulf %17, %16 : vector<2x1024xf32>
    %19 = arith.addf %13, %18 : vector<2x1024xf32>
    %cst_5 = arith.constant 3.090170e-01 : f32
    %20 = vector.broadcast %cst_5 : f32 to vector<2x1024xf32>
    %21 = arith.addf %19, %20 : vector<2x1024xf32>
    %c0_6 = arith.constant 0 : index
    %c0_7 = arith.constant 0 : index
    %22 = vector.load %arg3[%c0_6, %c0_7] : memref<2x1024xf32, #tpu.memory_space<vmem>>, vector<2x1024xf32>
    tpu.vector_store %arg3[%c0_6, %c0_7], %21 {strides = array<i32>} : memref<2x1024xf32, #tpu.memory_space<vmem>>, vector<2x1024xf32>,
    return
  }
  func.func @transform_0(%arg0: i32) -> i32 {
    %c0_i32 = arith.constant 0 : i32
    %c0_i32_0 = arith.constant 0 : i32
    return %c0_i32 : i32
  }
  func.func @transform_1(%arg0: i32) -> (i32, i32) {
    %c0_i32 = arith.constant 0 : i32
    %c0_i32_0 = arith.constant 0 : i32
    return %arg0, %c0_i32 : i32, i32
  }
  func.func @transform_2(%arg0: i32) -> (i32, i32) {
    %c0_i32 = arith.constant 0 : i32
    %c0_i32_0 = arith.constant 0 : i32
    return %arg0, %c0_i32 : i32, i32
  }
}

</mosaic_0001>

<llo_original>
// kernel: tpu_custom_call.1
$region0: #{tpu_custom_call.1}
  #allocation0 [shape = 'u32[]', space=smem, size = 0x4, offset = 0x4, fixed_abs, tag = 'smem constant byte address 0x4 - core index']
  #allocation1 [shape = 'u32[144,128]{1,0:T(1,128)}', space=vmem, size = 0x12000, scoped, tag = 'internal scratch']
  %s0 = inlined_call_operand.hbm [shape: f32[2], index: 0, kind: input, shape index: {}]
  %s1 = inlined_call_operand.hbm [shape: f32[2,1024], index: 1, kind: input, shape index: {}]
  %s2 = inlined_call_operand.hbm [shape: f32[2,1024], index: 2, kind: output, shape index: {}]
  %s3 = sld [smem:[#allocation0]]
  $region26: #{tpu_custom_call.1} parent=0
    _
  %s5 = ssub.s32 1, %s3
  %s6 = scalar_select 0, %s5, %s3
  $region1: #{tpu_custom_call.1} parent=0
    #allocation2 [shape = 'u8[512]{0}', space=smem, size = 0x200, scoped, tag = 'input window, operand 0, single buffered']
    #allocation3 [shape = 's32[1]{0}', space=sflag, size = 0x4, scoped, tag = 'scoped memory for tpu_custom_call.1']
    #allocation4 [shape = 's32[1]{0}', space=sflag, size = 0x4, scoped, tag = 'scoped memory for tpu_custom_call.1']
    #allocation5 [shape = 's32[1]{0}', space=sflag, size = 0x4, scoped, tag = 'scoped memory for tpu_custom_call.1']
    #allocation6 [shape = 'u8[8192]{0}', space=vmem, size = 0x2000, scoped, tag = 'input window, operand 1, single buffered']
    #allocation7 [shape = 'u8[8192]{0}', space=vmem, size = 0x2000, scoped, tag = 'output window, operand 0, single buffered']
    %7 = vsyncpa [#allocation5], 0
    %8 = vsyncpa [#allocation3], 0
    %9 = vsyncpa [#allocation4], 0
    // Predicated region
    $region2: #{tpu_custom_call.1} parent=1 // pred_check
      _
    $region3: #{tpu_custom_call.1} parent=1 // pred_check_branch
      %11 = sbr.rel (0) target = $region5
    $region4: #{tpu_custom_call.1} parent=1 // pred_region
      %s13 = ssub.s32 16, 16
      %14 = vsyncadd [#allocation5], %s13
      %17 = dma.hbm_to_smem %s0, 16, [#allocation2], [#allocation5]
    $region5: #{tpu_custom_call.1} parent=1 // pred_fallthru
      _
    // Predicated region
    $region6: #{tpu_custom_call.1} parent=1 // pred_check
      _
    $region7: #{tpu_custom_call.1} parent=1 // pred_check_branch
      %19 = sbr.rel (0) target = $region9
    $region8: #{tpu_custom_call.1} parent=1 // pred_region
      %s21 = ssub.s32 256, 256
      %22 = vsyncadd [#allocation3], %s21
      %s24 = sshll.u32 [#allocation6], 4
      %s25 = int_to_ptr.vmem [resolvable:$true] %s24
      %27 = dma.hbm_to_vmem [thread:$0]  %s1, 256, %s25, [#allocation3]
    $region9: #{tpu_custom_call.1} parent=1 // pred_fallthru
      _
    // Predicated region
    $region10: #{tpu_custom_call.1} parent=1 // pred_check
      _
    $region11: #{tpu_custom_call.1} parent=1 // pred_check_branch
      %29 = sbr.rel (0) target = $region13
    $region12: #{tpu_custom_call.1} parent=1 // pred_region
      %30 = dma.done [#allocation5], 16
    $region13: #{tpu_custom_call.1} parent=1 // pred_fallthru
      _
    // Predicated region
    $region14: #{tpu_custom_call.1} parent=1 // pred_check
      _
    $region15: #{tpu_custom_call.1} parent=1 // pred_check_branch
      %32 = sbr.rel (0) target = $region17
    $region16: #{tpu_custom_call.1} parent=1 // pred_region
      %33 = dma.done [#allocation3], 256
    $region17: #{tpu_custom_call.1} parent=1 // pred_fallthru
      _
    %34 = sfence
    %v35 = vld [vmem:[#allocation6] sm:$0xff]
    %v36 = vld [vmem:[#allocation6 + $0x8] sm:$0xff]
    %s37 = sld [smem:[#allocation2]]
    %s38 = sld [smem:[#allocation2 + $0x1]]
    %v39 = vmul.f32 %v35, 0.809017
    %v40 = vmul.f32 %v36, 0.809017
    %v41 = vtanh.pop %v39
    %v42 = vtanh.pop %v40
    %v43 = vmul.f32 %v41, 0.309017
    %v44 = vmul.f32 %v42, 0.309017
    %v45 = vmul.f32 %v35, 0.618034
    %v46 = vmul.f32 %v36, 0.618034
    %v47 = vtanh.pop %v45
    %v48 = vtanh.pop %v46
    %v49 = vstv %s37
    %v50 = vmul.f32 %v49, %v47
    %v51 = vmul.f32 %v49, %v48
    %v52 = vadd.f32 %v43, %v50
    %v53 = vadd.f32 %v44, %v51
    %v54 = vmul.f32 %v35, 1.1557274
    %v55 = vmul.f32 %v36, 1.1557274
    %v56 = vand.u32 2147483647, %v54
    %vm57 = vcmp.le.f32.partialorder %v56, 0.7853982
    %vm58 = vcmp.lt.s32.totalorder %v54, 0
    %v59 = vand.u32 %v54, 2139095040
    %v60 = vshrl.u32 %v59, 23
    %v61 = vsub.s32 %v60, 127
    %v62 = vand.u32 2147483647, %v54
    %v63 = vand.u32 %v62, 8388607
    %v64 = vor.u32 %v63, 8388608
    %v65 = vsub.s32 0, %v64
    %v66 = vadd.s32 %v61, 1
    %vm67 = vcmp.gt.s32.totalorder %v66, 0
    %v68 = vsel %vm67, %v66, 0
    %v69 = vshrl.u32 %v68, 5
    %v70 = vand.u32 %v68, 31
    %v71 = vsub.s32 32, %v70
    %v72 = vshrl.u32 683565275, %v71
    %v73 = vshll.u32 683565275, %v70
    %v74 = vshrl.u32 2475754826, %v71
    %v75 = vor.u32 %v73, %v74
    %v76 = vshll.u32 2475754826, %v70
    %v77 = vshrl.u32 2131351028, %v71
    %v78 = vor.u32 %v76, %v77
    %v79 = vshll.u32 2131351028, %v70
    %v80 = vshrl.u32 2102212464, %v71
    %v81 = vor.u32 %v79, %v80
    %v82 = vshll.u32 2102212464, %v70
    %v83 = vshrl.u32 920167782, %v71
    %v84 = vor.u32 %v82, %v83
    %v85 = vshll.u32 920167782, %v70
    %v86 = vshrl.u32 1326507024, %v71
    %v87 = vor.u32 %v85, %v86
    %vm88 = vcmp.lt.s32.totalorder %v69, 1
    %vm89 = vcmp.lt.s32.totalorder %v69, 2
    %vm90 = vcmp.lt.s32.totalorder %v69, 3
    %vm91 = vcmp.lt.s32.totalorder %v69, 4
    %v92 = vsel %vm88, %v72, %v75
    %v93 = vsel %vm91, %v81, 2102212464
    %v94 = vsel %vm90, %v78, %v93
    %v95 = vsel %vm89, %v92, %v94
    %v96 = vsel %vm88, %v75, %v78
    %v97 = vsel %vm91, %v84, 920167782
    %v98 = vsel %vm90, %v81, %v97
    %v99 = vsel %vm89, %v96, %v98
    %v100 = vsel %vm88, %v78, %v81
    %v101 = vsel %vm91, %v87, 1326507024
    %v102 = vsel %vm90, %v84, %v101
    %v103 = vsel %vm89, %v100, %v102
    %v104 = vshll.u32 %v64, 8
    %v105 = vmul.u32.u64.compose %v104, %v103
    %v106 = vextract.low.u32 %v105
    %v107 = vextract.high.u32 %v105
    %v108 = vmul.u32.u64.compose %v104, %v99
    %v109 = vextract.low.u32 %v108
    %v110 = vextract.high.u32 %v108
    %v111 = vmul.u32 %v104, %v95
    %v112 = vadd.s32 %v107, %v109
    %vm113 = vc.u32 %v107, %v109
    %v114 = vadd.s32 %v110, 1
    %v115 = vsel %vm113, %v114, %v110
    %v116 = vadd.s32 %v111, %v115
    %v117 = vadd.s32 %v116, 536870912
    %v118 = vshrl.u32 %v117, 30
    %v119 = vshll.u32 %v118, 30
    %v120 = vsub.s32 %v116, %v119
    %vm121 = vcmp.lt.s32.totalorder %v120, 0
    %v122 = vsub.s32 0, %v120
    %v123 = vsel %vm121, %v122, %v120
    %v124 = vclz %v123
    %v125 = vsub.s32 %v124, 2
    %vm126 = vcmp.gt.s32.totalorder 0, %v125
    %v127 = vsel %vm126, 0, %v125
    %v128 = vsub.s32 32, %v127
    %v129 = vshll.u32 %v120, %v127
    %v130 = vshrl.u32 %v112, %v128
    %v131 = vor.u32 %v129, %v130
    %v132 = vsub.s32 4294967266, %v127
    %v133 = vadd.s32 %v132, 127
    %v134 = vshll.u32 %v133, 23
    %v135 = vor.u32 4788187, %v134
    %v136 = vand.u32 2147483647, %v135
    %v138 = vcvt.s32.f32 %v131
    %v139 = vmul.f32 %v138, %v136
    %v140 = vxor.u32 %v139, 2147483648
    %v141 = vsel %vm58, %v140, %v139
    %v142 = vsub.s32 4, %v118
    %v143 = vsel %vm58, %v142, %v118
    %v144 = vsel %vm57, %v54, %v141
    %v145 = vsel %vm57, 0, %v143
    %v146 = vcosq.f32.pop %v144
    %v147 = vsinq.f32.pop %v144
    %vm148 = vweird.f32 %v54
    %v149 = vadd.s32 %v145, 3
    %v150 = vand.u32 %v149, 3
    %vm151 = vcmp.lt.s32.totalorder %v150, 2
    %vm152 = vcmp.eq.s32.totalorder %v150, 0
    %v153 = vxor.u32 %v147, 2147483648
    %v154 = vsel %vm152, %v146, %v153
    %vm155 = vcmp.eq.s32.totalorder %v150, 2
    %v156 = vxor.u32 %v146, 2147483648
    %v157 = vsel %vm155, %v156, %v147
    %v158 = vsel %vm151, %v154, %v157
    %v159 = vsel %vm148, nan, %v158
    %v160 = vand.u32 2147483647, %v55
    %vm161 = vcmp.le.f32.partialorder %v160, 0.7853982
    %vm162 = vcmp.lt.s32.totalorder %v55, 0
    %v163 = vand.u32 %v55, 2139095040
    %v164 = vshrl.u32 %v163, 23
    %v165 = vsub.s32 %v164, 127
    %v166 = vand.u32 2147483647, %v55
    %v167 = vand.u32 %v166, 8388607
    %v168 = vor.u32 %v167, 8388608
    %v169 = vsub.s32 0, %v168
    %v170 = vadd.s32 %v165, 1
    %vm171 = vcmp.gt.s32.totalorder %v170, 0
    %v172 = vsel %vm171, %v170, 0
    %v173 = vshrl.u32 %v172, 5
    %v174 = vand.u32 %v172, 31
    %v175 = vsub.s32 32, %v174
    %v176 = vshrl.u32 683565275, %v175
    %v177 = vshll.u32 683565275, %v174
    %v178 = vshrl.u32 2475754826, %v175
    %v179 = vor.u32 %v177, %v178
    %v180 = vshll.u32 2475754826, %v174
    %v181 = vshrl.u32 2131351028, %v175
    %v182 = vor.u32 %v180, %v181
    %v183 = vshll.u32 2131351028, %v174
    %v184 = vshrl.u32 2102212464, %v175
    %v185 = vor.u32 %v183, %v184
    %v186 = vshll.u32 2102212464, %v174
    %v187 = vshrl.u32 920167782, %v175
    %v188 = vor.u32 %v186, %v187
    %v189 = vshll.u32 920167782, %v174
    %v190 = vshrl.u32 1326507024, %v175
    %v191 = vor.u32 %v189, %v190
    %vm192 = vcmp.lt.s32.totalorder %v173, 1
    %vm193 = vcmp.lt.s32.totalorder %v173, 2
    %vm194 = vcmp.lt.s32.totalorder %v173, 3
    %vm195 = vcmp.lt.s32.totalorder %v173, 4
    %v196 = vsel %vm192, %v176, %v179
    %v197 = vsel %vm195, %v185, 2102212464
    %v198 = vsel %vm194, %v182, %v197
    %v199 = vsel %vm193, %v196, %v198
    %v200 = vsel %vm192, %v179, %v182
    %v201 = vsel %vm195, %v188, 920167782
    %v202 = vsel %vm194, %v185, %v201
    %v203 = vsel %vm193, %v200, %v202
    %v204 = vsel %vm192, %v182, %v185
    %v205 = vsel %vm195, %v191, 1326507024
    %v206 = vsel %vm194, %v188, %v205
    %v207 = vsel %vm193, %v204, %v206
    %v208 = vshll.u32 %v168, 8
    %v209 = vmul.u32.u64.compose %v208, %v207
    %v210 = vextract.low.u32 %v209
    %v211 = vextract.high.u32 %v209
    %v212 = vmul.u32.u64.compose %v208, %v203
    %v213 = vextract.low.u32 %v212
    %v214 = vextract.high.u32 %v212
    %v215 = vmul.u32 %v208, %v199
    %v216 = vadd.s32 %v211, %v213
    %vm217 = vc.u32 %v211, %v213
    %v218 = vadd.s32 %v214, 1
    %v219 = vsel %vm217, %v218, %v214
    %v220 = vadd.s32 %v215, %v219
    %v221 = vadd.s32 %v220, 536870912
    %v222 = vshrl.u32 %v221, 30
    %v223 = vshll.u32 %v222, 30
    %v224 = vsub.s32 %v220, %v223
    %vm225 = vcmp.lt.s32.totalorder %v224, 0
    %v226 = vsub.s32 0, %v224
    %v227 = vsel %vm225, %v226, %v224
    %v228 = vclz %v227
    %v229 = vsub.s32 %v228, 2
    %vm230 = vcmp.gt.s32.totalorder 0, %v229
    %v231 = vsel %vm230, 0, %v229
    %v232 = vsub.s32 32, %v231
    %v233 = vshll.u32 %v224, %v231
    %v234 = vshrl.u32 %v216, %v232
    %v235 = vor.u32 %v233, %v234
    %v236 = vsub.s32 4294967266, %v231
    %v237 = vadd.s32 %v236, 127
    %v238 = vshll.u32 %v237, 23
    %v239 = vor.u32 4788187, %v238
    %v240 = vand.u32 2147483647, %v239
    %v242 = vcvt.s32.f32 %v235
    %v243 = vmul.f32 %v242, %v240
    %v244 = vxor.u32 %v243, 2147483648
    %v245 = vsel %vm162, %v244, %v243
    %v246 = vsub.s32 4, %v222
    %v247 = vsel %vm162, %v246, %v222
    %v248 = vsel %vm161, %v55, %v245
    %v249 = vsel %vm161, 0, %v247
    %v250 = vcosq.f32.pop %v248
    %v251 = vsinq.f32.pop %v248
    %vm252 = vweird.f32 %v55
    %v253 = vadd.s32 %v249, 3
    %v254 = vand.u32 %v253, 3
    %vm255 = vcmp.lt.s32.totalorder %v254, 2
    %vm256 = vcmp.eq.s32.totalorder %v254, 0
    %v257 = vxor.u32 %v251, 2147483648
    %v258 = vsel %vm256, %v250, %v257
    %vm259 = vcmp.eq.s32.totalorder %v254, 2
    %v260 = vxor.u32 %v250, 2147483648
    %v261 = vsel %vm259, %v260, %v251
    %v262 = vsel %vm255, %v258, %v261
    %v263 = vsel %vm252, nan, %v262
    %v264 = vstv %s38
    %v265 = vmul.f32 %v264, %v159
    %v266 = vmul.f32 %v264, %v263
    %v267 = vadd.f32 %v52, %v265
    %v268 = vadd.f32 %v53, %v266
    %v269 = vadd.f32 %v267, 0.309017
    %v270 = vadd.f32 %v268, 0.309017
    %271 = vst [vmem:[#allocation7] sm:$0xff] %v269
    %272 = vst [vmem:[#allocation7 + $0x8] sm:$0xff] %v270
    // Predicated region
    $region18: #{tpu_custom_call.1} parent=1 // pred_check
      _
    $region19: #{tpu_custom_call.1} parent=1 // pred_check_branch
      %274 = sbr.rel (0) target = $region21
    $region20: #{tpu_custom_call.1} parent=1 // pred_region
      %s276 = ssub.s32 256, 256
      %277 = vsyncadd [#allocation4], %s276
      %s279 = sshll.u32 [#allocation7], 4
      %s280 = int_to_ptr.vmem [resolvable:$true] %s279
      %282 = dma.vmem_to_hbm [thread:$0]  %s280, 256, %s2, [#allocation4]
    $region21: #{tpu_custom_call.1} parent=1 // pred_fallthru
      _
    // Predicated region
    $region22: #{tpu_custom_call.1} parent=1 // pred_check
      _
    $region23: #{tpu_custom_call.1} parent=1 // pred_check_branch
      %284 = sbr.rel (0) target = $region25
    $region24: #{tpu_custom_call.1} parent=1 // pred_region
      %285 = dma.done [#allocation4], 256
    $region25: #{tpu_custom_call.1} parent=1 // pred_fallthru
      _
    %286 = vsyncpa [#allocation3], 1
    %287 = vsyncpa [#allocation4], 1
    %288 = vsyncpa [#allocation5], 1

</llo_original>
